<compile_context>
chip_gen: v7x
topology: tpu7x:2x2x1
jax: 0.10.0
libtpu: 0.0.40
codegen_flags: <defaults>
</compile_context>

<pallas_src>
import math

import numpy as np
import jax
import jax.numpy as jnp
from jax.experimental import pallas as pl
from jax.experimental.pallas import tpu as pltpu

XIC_KEY = "XIC"


def _dup_kernel(idx_ref, x_ref, out_ref):
    """idx_ref: VMEM (R, 1) int32 -- source transition row for each output row.
    x_ref  : VMEM (C, L)        -- one time-tile of all C transitions.
    out_ref: VMEM (R, L)        -- the same time-tile of ALL duplicates (R = (D+1)*C)."""
    x = x_ref[...]                        # load the whole tile once
    idx = idx_ref[...]                    # (R, 1) gather indices, resident in VMEM
    C = x_ref.shape[0]

    # One-hot select: C is small and static, so unroll over the candidate source
    # rows; each step is a dense vectorized select over the full (R, L) tile.
    # Exact copy semantics (no arithmetic), single dense store at the end.
    out = jnp.zeros(out_ref.shape, dtype=x.dtype)
    for c in range(C):
        out = jnp.where(idx == c, x[c:c + 1, :], out)
    out_ref[...] = out                    # one unmasked full-tile store


def _pick_lane_tile(T, out_rows, itemsize, A, target_bytes=4 << 20):
    """Largest lane tile (multiple of 128 dividing T, or full T) whose output
    block stays under ~target_bytes, keeping >=2 grid steps for megacore."""
    if T % 128 != 0:
        return T                          # full-extent block is always legal
    cands = [d for d in range(128, T + 1, 128) if T % d == 0]
    fitting = [d for d in cands if out_rows * d * itemsize <= target_bytes]
    lane = max(fitting) if fitting else min(cands)
    if A * (T // lane) < 2:               # keep both v7x TensorCores fed
        smaller = [d for d in cands if d < lane]
        if smaller:
            lane = max(smaller)
    return lane


def _duplicate_transitions_impl(xic: jax.Array, gather_idx2d: jax.Array) -> jax.Array:
    """xic: [A, C, T]; gather_idx2d: [R, 1] int32 (identity block first).
    Returns [A, R, T] == xic[:, gather_idx, :] (gather done on-TPU)."""
    A, C, T = xic.shape
    R = gather_idx2d.shape[0]
    itemsize = jnp.dtype(xic.dtype).itemsize

    lane_tile = _pick_lane_tile(T, R, itemsize, A)
    n_t = T // lane_tile

    return pl.pallas_call(
        _dup_kernel,
        out_shape=jax.ShapeDtypeStruct((A, R, T), xic.dtype),
        grid=(A, n_t),
        in_specs=[
            # Gather table: constant block index -> DMA'd once, stays resident.
            pl.BlockSpec((R, 1), lambda a, t: (0, 0)),
            # Input time-tile of all C transitions for sample a.
            pl.BlockSpec((None, C, lane_tile), lambda a, t: (a, 0, t)),
        ],
        # Fused duplicate axis: one block carries all R output rows of the tile.
        out_specs=pl.BlockSpec((None, R, lane_tile), lambda a, t: (a, 0, t)),
        compiler_params=pltpu.CompilerParams(
            dimension_semantics=("parallel", "parallel"),
        ),
        cost_estimate=pl.CostEstimate(
            flops=0,
            transcendentals=0,
            bytes_accessed=(A * C * T + A * R * T) * itemsize,
        ),
    )(gather_idx2d, xic)


_duplicate_transitions = jax.jit(_duplicate_transitions_impl)


def transition_duplicate(sample: dict, max_num_duplication: int = 8) -> dict:
    """Pallas analogue of TransitionDuplicate.forward."""
    xic = sample[XIC_KEY]
    num_transition_pairs = xic.shape[1]
    if num_transition_pairs < 4:
        return sample
    num_duplication = min(math.comb(num_transition_pairs, 3), max_num_duplication)

    # TODO(synk): index selection uses host-side np.random (choice/permutation)
    # exactly as the original module; only the gather/concat runs on-TPU.
    index = np.arange(num_transition_pairs)
    perms = [index]
    prev_index = index
    for _ in range(num_duplication):
        bd_index = prev_index[-2:]
        bd_index2 = np.random.choice(np.setdiff1d(index, bd_index),
                                     replace=False, size=2)
        cur_index = np.concatenate(
            (bd_index2, np.random.permutation(np.setdiff1d(index, bd_index2))))
        perms.append(cur_index)
        prev_index = cur_index

    gather_idx = np.concatenate(perms).astype(np.int32)
    # Host-side validation (VMEM refs have no runtime bounds checks on TPU).
    assert gather_idx.min() >= 0 and gather_idx.max() < num_transition_pairs
    gather_idx2d = jnp.asarray(gather_idx.reshape(-1, 1))

    out = dict(sample)
    out[XIC_KEY] = _duplicate_transitions(xic, gather_idx2d)
    return out


if __name__ == "__main__":
    key = jax.random.PRNGKey(0)

    # Small deterministic example consistent with the module:
    # 2 (light/heavy) x 8 transition pairs x 128 time points.
    A, C, T = 2, 8, 128
    xic = jax.random.uniform(key, (A, C, T), dtype=jnp.float32)
    sample = {XIC_KEY: xic, "start_time": 0.0}

    # Run the Pallas-backed transform (host permutation RNG seeded for determinism).
    np.random.seed(0)
    result = transition_duplicate(sample, max_num_duplication=8)
    new_xic = np.asarray(jax.block_until_ready(result[XIC_KEY]))

    # Numpy reference: replay the exact original module logic with the same RNG.
    np.random.seed(0)
    xic_np = np.asarray(xic)
    num_dup = min(math.comb(C, 3), 8)
    index = np.arange(C)
    dup = [xic_np]
    prev = index
    for _ in range(num_dup):
        bd = prev[-2:]
        bd2 = np.random.choice(np.setdiff1d(index, bd), replace=False, size=2)
        cur = np.concatenate((bd2, np.random.permutation(np.setdiff1d(index, bd2))))
        dup.append(xic_np[:, cur, :])
        prev = cur
    expected = np.concatenate(dup, axis=1)

    assert new_xic.shape == expected.shape, (new_xic.shape, expected.shape)
    np.testing.assert_array_equal(new_xic, expected)

    # Early-return path: fewer than 4 transition pairs leaves the sample untouched.
    small = {XIC_KEY: xic[:, :3, :]}
    assert transition_duplicate(small)[XIC_KEY] is small[XIC_KEY]

    print("KERNEL_OK")
</pallas_src>

<mosaic_0001>
module attributes {stable_mosaic.version = 11 : i64} {
  func.func @_dup_kernel(%arg0: i32, %arg1: i32, %arg2: memref<72x1xi32, #tpu.memory_space<vmem>>, %arg3: memref<1x8x128xf32, #tpu.memory_space<vmem>>, %arg4: memref<1x72x128xf32, #tpu.memory_space<vmem>>) attributes {dimension_semantics = [#tpu.dimension_semantics<parallel>, #tpu.dimension_semantics<parallel>], iteration_bounds = array<i64: 2, 1>, scalar_prefetch = 0 : i64, scratch_operands = 0 : i64, tpu.core_type = #tpu.core_type<tc>, window_params = [{pipeline_mode = #tpu.pipeline_mode<synchronous>, transform_indices = @transform_0, window_bounds = array<i64: 72, 1>}, {transform_indices = @transform_1, window_bounds = array<i64: 1, 8, 128>}, {transform_indices = @transform_2, window_bounds = array<i64: 1, 72, 128>}]} {
    %c0 = arith.constant 0 : index
    %c0_0 = arith.constant 0 : index
    %c0_1 = arith.constant 0 : index
    %0 = vector.load %arg3[%c0, %c0_0, %c0_1] : memref<1x8x128xf32, #tpu.memory_space<vmem>>, vector<1x8x128xf32>
    %1 = vector.shape_cast %0 : vector<1x8x128xf32> to vector<8x128xf32>
    %c0_2 = arith.constant 0 : index
    %c0_3 = arith.constant 0 : index
    %2 = vector.load %arg2[%c0_2, %c0_3] : memref<72x1xi32, #tpu.memory_space<vmem>>, vector<72x1xi32>
    %cst = arith.constant 0.000000e+00 : f32
    %3 = vector.broadcast %cst : f32 to vector<72x128xf32>
    %c0_i32 = arith.constant 0 : i32
    %4 = vector.broadcast %c0_i32 : i32 to vector<72x1xi32>
    %5 = arith.cmpi eq, %2, %4 : vector<72x1xi32>
    %6 = vector.extract_strided_slice %1 {offsets = [0, 0], sizes = [1, 128], strides = [1, 1]} : vector<8x128xf32> to vector<1x128xf32>
    %7 = vector.shape_cast %5 : vector<72x1xi1> to vector<72x1xi1>
    %8 = vector.broadcast %7 : vector<72x1xi1> to vector<72x128xi1>
    %9 = vector.shape_cast %6 : vector<1x128xf32> to vector<1x128xf32>
    %10 = vector.broadcast %9 : vector<1x128xf32> to vector<72x128xf32>
    %11 = arith.select %8, %10, %3 : vector<72x128xi1>, vector<72x128xf32>
    %c1_i32 = arith.constant 1 : i32
    %12 = vector.broadcast %c1_i32 : i32 to vector<72x1xi32>
    %13 = arith.cmpi eq, %2, %12 : vector<72x1xi32>
    %14 = vector.extract_strided_slice %1 {offsets = [1, 0], sizes = [1, 128], strides = [1, 1]} : vector<8x128xf32> to vector<1x128xf32>
    %15 = vector.shape_cast %13 : vector<72x1xi1> to vector<72x1xi1>
    %16 = vector.broadcast %15 : vector<72x1xi1> to vector<72x128xi1>
    %17 = vector.shape_cast %14 : vector<1x128xf32> to vector<1x128xf32>
    %18 = vector.broadcast %17 : vector<1x128xf32> to vector<72x128xf32>
    %19 = arith.select %16, %18, %11 : vector<72x128xi1>, vector<72x128xf32>
    %c2_i32 = arith.constant 2 : i32
    %20 = vector.broadcast %c2_i32 : i32 to vector<72x1xi32>
    %21 = arith.cmpi eq, %2, %20 : vector<72x1xi32>
    %22 = vector.extract_strided_slice %1 {offsets = [2, 0], sizes = [1, 128], strides = [1, 1]} : vector<8x128xf32> to vector<1x128xf32>
    %23 = vector.shape_cast %21 : vector<72x1xi1> to vector<72x1xi1>
    %24 = vector.broadcast %23 : vector<72x1xi1> to vector<72x128xi1>
    %25 = vector.shape_cast %22 : vector<1x128xf32> to vector<1x128xf32>
    %26 = vector.broadcast %25 : vector<1x128xf32> to vector<72x128xf32>
    %27 = arith.select %24, %26, %19 : vector<72x128xi1>, vector<72x128xf32>
    %c3_i32 = arith.constant 3 : i32
    %28 = vector.broadcast %c3_i32 : i32 to vector<72x1xi32>
    %29 = arith.cmpi eq, %2, %28 : vector<72x1xi32>
    %30 = vector.extract_strided_slice %1 {offsets = [3, 0], sizes = [1, 128], strides = [1, 1]} : vector<8x128xf32> to vector<1x128xf32>
    %31 = vector.shape_cast %29 : vector<72x1xi1> to vector<72x1xi1>
    %32 = vector.broadcast %31 : vector<72x1xi1> to vector<72x128xi1>
    %33 = vector.shape_cast %30 : vector<1x128xf32> to vector<1x128xf32>
    %34 = vector.broadcast %33 : vector<1x128xf32> to vector<72x128xf32>
    %35 = arith.select %32, %34, %27 : vector<72x128xi1>, vector<72x128xf32>
    %c4_i32 = arith.constant 4 : i32
    %36 = vector.broadcast %c4_i32 : i32 to vector<72x1xi32>
    %37 = arith.cmpi eq, %2, %36 : vector<72x1xi32>
    %38 = vector.extract_strided_slice %1 {offsets = [4, 0], sizes = [1, 128], strides = [1, 1]} : vector<8x128xf32> to vector<1x128xf32>
    %39 = vector.shape_cast %37 : vector<72x1xi1> to vector<72x1xi1>
    %40 = vector.broadcast %39 : vector<72x1xi1> to vector<72x128xi1>
    %41 = vector.shape_cast %38 : vector<1x128xf32> to vector<1x128xf32>
    %42 = vector.broadcast %41 : vector<1x128xf32> to vector<72x128xf32>
    %43 = arith.select %40, %42, %35 : vector<72x128xi1>, vector<72x128xf32>
    %c5_i32 = arith.constant 5 : i32
    %44 = vector.broadcast %c5_i32 : i32 to vector<72x1xi32>
    %45 = arith.cmpi eq, %2, %44 : vector<72x1xi32>
    %46 = vector.extract_strided_slice %1 {offsets = [5, 0], sizes = [1, 128], strides = [1, 1]} : vector<8x128xf32> to vector<1x128xf32>
    %47 = vector.shape_cast %45 : vector<72x1xi1> to vector<72x1xi1>
    %48 = vector.broadcast %47 : vector<72x1xi1> to vector<72x128xi1>
    %49 = vector.shape_cast %46 : vector<1x128xf32> to vector<1x128xf32>
    %50 = vector.broadcast %49 : vector<1x128xf32> to vector<72x128xf32>
    %51 = arith.select %48, %50, %43 : vector<72x128xi1>, vector<72x128xf32>
    %c6_i32 = arith.constant 6 : i32
    %52 = vector.broadcast %c6_i32 : i32 to vector<72x1xi32>
    %53 = arith.cmpi eq, %2, %52 : vector<72x1xi32>
    %54 = vector.extract_strided_slice %1 {offsets = [6, 0], sizes = [1, 128], strides = [1, 1]} : vector<8x128xf32> to vector<1x128xf32>
    %55 = vector.shape_cast %53 : vector<72x1xi1> to vector<72x1xi1>
    %56 = vector.broadcast %55 : vector<72x1xi1> to vector<72x128xi1>
    %57 = vector.shape_cast %54 : vector<1x128xf32> to vector<1x128xf32>
    %58 = vector.broadcast %57 : vector<1x128xf32> to vector<72x128xf32>
    %59 = arith.select %56, %58, %51 : vector<72x128xi1>, vector<72x128xf32>
    %c7_i32 = arith.constant 7 : i32
    %60 = vector.broadcast %c7_i32 : i32 to vector<72x1xi32>
    %61 = arith.cmpi eq, %2, %60 : vector<72x1xi32>
    %62 = vector.extract_strided_slice %1 {offsets = [7, 0], sizes = [1, 128], strides = [1, 1]} : vector<8x128xf32> to vector<1x128xf32>
    %63 = vector.shape_cast %61 : vector<72x1xi1> to vector<72x1xi1>
    %64 = vector.broadcast %63 : vector<72x1xi1> to vector<72x128xi1>
    %65 = vector.shape_cast %62 : vector<1x128xf32> to vector<1x128xf32>
    %66 = vector.broadcast %65 : vector<1x128xf32> to vector<72x128xf32>
    %67 = arith.select %64, %66, %59 : vector<72x128xi1>, vector<72x128xf32>
    %c0_4 = arith.constant 0 : index
    %c0_5 = arith.constant 0 : index
    %c0_6 = arith.constant 0 : index
    %68 = vector.load %arg4[%c0_4, %c0_5, %c0_6] : memref<1x72x128xf32, #tpu.memory_space<vmem>>, vector<1x72x128xf32>
    %69 = vector.shape_cast %68 : vector<1x72x128xf32> to vector<72x128xf32>
    %70 = vector.shape_cast %67 : vector<72x128xf32> to vector<1x72x128xf32>
    tpu.vector_store %arg4[%c0_4, %c0_5, %c0_6], %70 {strides = array<i32>} : memref<1x72x128xf32, #tpu.memory_space<vmem>>, vector<1x72x128xf32>,
    return
  }
  func.func @transform_0(%arg0: i32, %arg1: i32) -> (i32, i32) {
    %c0_i32 = arith.constant 0 : i32
    %c0_i32_0 = arith.constant 0 : i32
    %c0_i32_1 = arith.constant 0 : i32
    return %c0_i32, %c0_i32_0 : i32, i32
  }
  func.func @transform_1(%arg0: i32, %arg1: i32) -> (i32, i32, i32) {
    %c0_i32 = arith.constant 0 : i32
    %c0_i32_0 = arith.constant 0 : i32
    return %arg0, %c0_i32, %arg1 : i32, i32, i32
  }
  func.func @transform_2(%arg0: i32, %arg1: i32) -> (i32, i32, i32) {
    %c0_i32 = arith.constant 0 : i32
    %c0_i32_0 = arith.constant 0 : i32
    return %arg0, %c0_i32, %arg1 : i32, i32, i32
  }
}

</mosaic_0001>

<llo_original>
// kernel: _duplicate_transitions_impl.1
$region0: #{_duplicate_transitions_impl.1}
  #allocation0 [shape = 'u32[]', space=smem, size = 0x4, offset = 0x4, fixed_abs, tag = 'smem constant byte address 0x4 - core index']
  #allocation1 [shape = 'u32[144,128]{1,0:T(1,128)}', space=vmem, size = 0x12000, scoped, tag = 'internal scratch']
  %s0 = inlined_call_operand.vmem [shape: s32[72,1], index: 0, kind: input, shape index: {}]
  %s1 = inlined_call_operand.vmem [shape: f32[2,8,128], index: 1, kind: input, shape index: {}]
  %s2 = inlined_call_operand.hbm [shape: f32[2,72,128], index: 2, kind: output, shape index: {}]
  %s3 = sld [smem:[#allocation0]]
  $region41: #{_duplicate_transitions_impl.1} parent=0
    _
  %s5 = ssub.s32 1, %s3
  %s6 = scalar_select 0, %s5, %s3
  $region1: #{_duplicate_transitions_impl.1} parent=0
    #allocation2 [shape = 'u8[73728]{0}', space=vmem, size = 0x12000, scoped, tag = 'output window, operand 0']
    #allocation3 [shape = 's32[2]{0}', space=sflag, size = 0x8, scoped, tag = 'scoped memory for _duplicate_transitions_impl.1']
    %7 = vsyncpa [#allocation3], 0
    %s8 = scalar_lea.sflag [#allocation3], 1
    %9 = vsyncpa %s8, 0
    loop: start=0, step=1, limit=4
    $region2: #{_duplicate_transitions_impl.1} parent=1 // loop_pre_header
      _
    $region3: #{_duplicate_transitions_impl.1} parent=1 // loop_header
      %s11 = sphi 0, %s15
      %p12 = scmp.ge.s32.totalorder %s11, 4
      %s18 = sphi 0, %s30
      %s19 = sphi 0, %s26
      %s20 = sphi 0, %s18
      %s21 = sphi 0, %s19
      %s22 = sphi 0, %s20
      %s23 = sphi 0, %s21
      %s31 = sphi 0, %s31
      %s33 = sphi 0, %s31
      %s34 = sphi 0, %s33
      %s48 = sphi 0, %s34
      %s56 = sphi 0, %s58
      %s59 = sphi 0, %s56
      %s60 = sphi 0, %s59
      %s76 = sphi 0, %s60
      %s84 = sphi 0, %s86
      %s87 = sphi 0, %s84
      %s88 = sphi 0, %s87
      %s104 = sphi 0, %s88
    $region4: #{_duplicate_transitions_impl.1} parent=1 // loop_header_branch
      %14 = sbr.rel (%p12) target = $region8
    $region5: #{_duplicate_transitions_impl.1} parent=1 // loop_body
      %s16 = ssub.s32 %s11, 1
      %s17 = ssub.s32 %s11, 2
      %s24 = sadd.s32 1, %s19
      %p25 = scmp.ge.s32.totalorder %s24, 1
      %s26 = scalar_select %p25, 0, %s24
      %s27 = sadd.s32 1, %s18
      %s28 = scalar_select %p25, %s27, %s18
      %p29 = scmp.ge.s32.totalorder %s28, 2
      %s30 = scalar_select %p29, 0, %s28
      %s32 = sadd.s32 %s31, 1
      %p35 = scmp.eq.s32.totalorder %s11, 1
      %p36 = scmp.ne.s32.totalorder %s31, %s33
      %p37 = scmp.eq.s32.totalorder %s11, 0
      %p38 = por %p36, %p37
      %p39 = scmp.ne.s32.totalorder %s31, %s33
      %p40 = scmp.eq.s32.totalorder %s16, 1
      %p41 = por %p39, %p40
      %p42 = scmp.ne.s32.totalorder %s33, %s34
      %p43 = scmp.eq.s32.totalorder %s16, 0
      %p44 = por %p42, %p43
      %p45 = scmp.ne.s32.totalorder %s33, %s34
      %p46 = scmp.eq.s32.totalorder %s17, 1
      %p47 = por %p45, %p46
      %p49 = scmp.ne.s32.totalorder %s34, %s48
      %p50 = scmp.eq.s32.totalorder %s17, 0
      %p51 = por %p49, %p50
      %s52 = ssub.s32 %s18, %s30
      %s53 = ssub.s32 %s19, %s26
      %s54 = sor.u32 %s52, %s53
      %p55 = scmp.eq.s32.totalorder %s54, 0
      %s57 = sadd.s32 %s56, 1
      %s58 = scalar_select %p55, %s56, %s57
      %p61 = pneg %p55
      %p62 = scmp.eq.s32.totalorder %s11, 1
      %p63 = por %p61, %p62
      %p64 = scmp.ne.s32.totalorder %s56, %s59
      %p65 = scmp.eq.s32.totalorder %s11, 0
      %p66 = por %p64, %p65
      %p67 = scmp.ne.s32.totalorder %s56, %s59
      %p68 = scmp.eq.s32.totalorder %s16, 1
      %p69 = por %p67, %p68
      %p70 = scmp.ne.s32.totalorder %s59, %s60
      %p71 = scmp.eq.s32.totalorder %s16, 0
      %p72 = por %p70, %p71
      %p73 = scmp.ne.s32.totalorder %s59, %s60
      %p74 = scmp.eq.s32.totalorder %s17, 1
      %p75 = por %p73, %p74
      %p77 = scmp.ne.s32.totalorder %s60, %s76
      %p78 = scmp.eq.s32.totalorder %s17, 0
      %p79 = por %p77, %p78
      %s80 = ssub.s32 %s18, %s30
      %s81 = ssub.s32 %s19, %s26
      %s82 = sor.u32 %s80, %s81
      %p83 = scmp.eq.s32.totalorder %s82, 0
      %s85 = sadd.s32 %s84, 1
      %s86 = scalar_select %p83, %s84, %s85
      %p89 = pneg %p83
      %p90 = scmp.eq.s32.totalorder %s11, 1
      %p91 = por %p89, %p90
      %p92 = scmp.ne.s32.totalorder %s84, %s87
      %p93 = scmp.eq.s32.totalorder %s11, 0
      %p94 = por %p92, %p93
      %p95 = scmp.ne.s32.totalorder %s84, %s87
      %p96 = scmp.eq.s32.totalorder %s16, 1
      %p97 = por %p95, %p96
      %p98 = scmp.ne.s32.totalorder %s87, %s88
      %p99 = scmp.eq.s32.totalorder %s16, 0
      %p100 = por %p98, %p99
      %p101 = scmp.ne.s32.totalorder %s87, %s88
      %p102 = scmp.eq.s32.totalorder %s17, 1
      %p103 = por %p101, %p102
      %p105 = scmp.ne.s32.totalorder %s88, %s104
      %p106 = scmp.eq.s32.totalorder %s17, 0
      %p107 = por %p105, %p106
      %p108 = scmp.le.s32.totalorder 1, %s11
      %p109 = scmp.lt.s32.totalorder %s11, 3
      %p110 = pnand %p108, %p109
      %p111 = pneg %p110
      // Predicated region
      $region9: #{_duplicate_transitions_impl.1} parent=5 // pred_check
        _
      $region10: #{_duplicate_transitions_impl.1} parent=5 // pred_check_branch
        %113 = sbr.rel (%p110) target = $region12
      $region11: #{_duplicate_transitions_impl.1} parent=5 // pred_region
        %s114 = ssub.s32 %s11, 1
        // Predicated region
        $region13: #{_duplicate_transitions_impl.1} parent=11 // pred_check
          %p115 = pneg %p44
        $region14: #{_duplicate_transitions_impl.1} parent=11 // pred_check_branch
          %117 = sbr.rel (%p115) target = $region16
        $region15: #{_duplicate_transitions_impl.1} parent=11 // pred_region
          _
        $region16: #{_duplicate_transitions_impl.1} parent=11 // pred_fallthru
          _
      $region12: #{_duplicate_transitions_impl.1} parent=5 // pred_fallthru
        _
      %p118 = scmp.lt.s32.totalorder %s11, 2
      // Predicated region
      $region17: #{_duplicate_transitions_impl.1} parent=5 // pred_check
        %p119 = pneg %p118
      $region18: #{_duplicate_transitions_impl.1} parent=5 // pred_check_branch
        %121 = sbr.rel (%p119) target = $region20
      $region19: #{_duplicate_transitions_impl.1} parent=5 // pred_region
        // Predicated region
        $region21: #{_duplicate_transitions_impl.1} parent=19 // pred_check
          %p122 = pneg %p66
        $region22: #{_duplicate_transitions_impl.1} parent=19 // pred_check_branch
          %124 = sbr.rel (%p122) target = $region24
        $region23: #{_duplicate_transitions_impl.1} parent=19 // pred_region
          %p125 = scmp.lt.s32.totalorder %s18, 1
          %s126 = scalar_select %p125, %s18, 1
          %p127 = scmp.lt.s32.totalorder %s19, 0
          %s128 = scalar_select %p127, %s19, 0
          %s129 = sadd.s32 %s128, %s126
          %s130 = smul.addr %s129, 8
          %s131 = scalar_lea.vmem %s1, %s130
        $region24: #{_duplicate_transitions_impl.1} parent=19 // pred_fallthru
          _
      $region20: #{_duplicate_transitions_impl.1} parent=5 // pred_fallthru
        _
      %p132 = scmp.le.s32.totalorder 1, %s11
      %p133 = scmp.lt.s32.totalorder %s11, 3
      %p134 = pnand %p132, %p133
      %p135 = pneg %p134
      // Predicated region
      $region25: #{_duplicate_transitions_impl.1} parent=5 // pred_check
        _
      $region26: #{_duplicate_transitions_impl.1} parent=5 // pred_check_branch
        %137 = sbr.rel (%p134) target = $region28
      $region27: #{_duplicate_transitions_impl.1} parent=5 // pred_region
        %s138 = ssub.s32 %s11, 1
        %p139 = pneg %p44
        %p140 = pneg %p41
        %p141 = scmp.lt.s32.totalorder %s20, 1
        %s142 = scalar_select %p141, %s20, 1
        %p143 = scmp.lt.s32.totalorder %s21, 0
        %s144 = scalar_select %p143, %s21, 0
        %s145 = sadd.s32 %s144, %s142
        %s146 = smul.addr %s145, 8
        %s147 = scalar_lea.vmem %s1, %s146
        %p148 = pneg %p72
        %p149 = pneg %p69
        %p150 = pneg %p100
        %p151 = pneg %p97
        %s152 = sand.u32 %s87, 1
        %s153 = scalar_lea.sflag [#allocation3], %s152
        %s154 = sand.u32 %s87, 1
        %s155 = smul.addr %s154, 72
        %s156 = scalar_lea.vmem [#allocation2], %s155
        %p157 = scmp.lt.s32.totalorder %s20, 1
        %s158 = scalar_select %p157, %s20, 1
        %p159 = scmp.lt.s32.totalorder %s21, 0
        %s160 = scalar_select %p159, %s21, 0
        %s161 = sadd.s32 %s160, %s158
        %s162 = smul.addr %s161, 8
        %s163 = scalar_lea.vmem %s1, %s162
        %v164 = vld [vmem:[%s163] sm:$0xff]
        %v165 = vld [vmem:[%s0] sm:$0xff]
        %v166 = vld [vmem:[%s0 + $0x8] sm:$0xff]
        %v167 = vld [vmem:[%s0 + $0x10] sm:$0xff]
        %v168 = vld [vmem:[%s0 + $0x18] sm:$0xff]
        %v169 = vld [vmem:[%s0 + $0x20] sm:$0xff]
        %v170 = vld [vmem:[%s0 + $0x28] sm:$0xff]
        %v171 = vld [vmem:[%s0 + $0x30] sm:$0xff]
        %v172 = vld [vmem:[%s0 + $0x38] sm:$0xff]
        %v173 = vld [vmem:[%s0 + $0x40] sm:$0xff]
        %vm174 = vcmp.eq.s32.totalorder %v165, 0
        %vm175 = vcmp.eq.s32.totalorder %v166, 0
        %vm176 = vcmp.eq.s32.totalorder %v167, 0
        %vm177 = vcmp.eq.s32.totalorder %v168, 0
        %vm178 = vcmp.eq.s32.totalorder %v169, 0
        %vm179 = vcmp.eq.s32.totalorder %v170, 0
        %vm180 = vcmp.eq.s32.totalorder %v171, 0
        %vm181 = vcmp.eq.s32.totalorder %v172, 0
        %vm182 = vcmp.eq.s32.totalorder %v173, 0
        %v183 = vsel %vm174, 1, 0
        %v184 = vsel %vm175, 1, 0
        %v185 = vsel %vm176, 1, 0
        %v186 = vsel %vm177, 1, 0
        %v187 = vsel %vm178, 1, 0
        %v188 = vsel %vm179, 1, 0
        %v189 = vsel %vm180, 1, 0
        %v190 = vsel %vm181, 1, 0
        %v191 = vsel %vm182, 1, 0
        %192 = vset.pattern.permute.xlu0 0
        %193 = vperm.xlu0 %192, %v183
        %v194 = vpop.permute.xlu0 %193
        %195 = vset.pattern.permute.xlu0 0
        %196 = vperm.xlu0 %195, %v184
        %v197 = vpop.permute.xlu0 %196
        %198 = vset.pattern.permute.xlu0 0
        %199 = vperm.xlu0 %198, %v185
        %v200 = vpop.permute.xlu0 %199
        %201 = vset.pattern.permute.xlu0 0
        %202 = vperm.xlu0 %201, %v186
        %v203 = vpop.permute.xlu0 %202
        %204 = vset.pattern.permute.xlu0 0
        %205 = vperm.xlu0 %204, %v187
        %v206 = vpop.permute.xlu0 %205
        %207 = vset.pattern.permute.xlu0 0
        %208 = vperm.xlu0 %207, %v188
        %v209 = vpop.permute.xlu0 %208
        %210 = vset.pattern.permute.xlu0 0
        %211 = vperm.xlu0 %210, %v189
        %v212 = vpop.permute.xlu0 %211
        %213 = vset.pattern.permute.xlu0 0
        %214 = vperm.xlu0 %213, %v190
        %v215 = vpop.permute.xlu0 %214
        %216 = vset.pattern.permute.xlu0 0
        %217 = vperm.xlu0 %216, %v191
        %v218 = vpop.permute.xlu0 %217
        %vm219 = vcmp.eq.s32.totalorder %v194, 1
        %vm220 = vcmp.eq.s32.totalorder %v197, 1
        %vm221 = vcmp.eq.s32.totalorder %v200, 1
        %vm222 = vcmp.eq.s32.totalorder %v203, 1
        %vm223 = vcmp.eq.s32.totalorder %v206, 1
        %vm224 = vcmp.eq.s32.totalorder %v209, 1
        %vm225 = vcmp.eq.s32.totalorder %v212, 1
        %vm226 = vcmp.eq.s32.totalorder %v215, 1
        %vm227 = vcmp.eq.s32.totalorder %v218, 1
        %v228 = vlaneseq
        %v229 = vshrl.u32 %v228, 7
        %v230 = vsub.s32 0, %v229
        %v231 = vrot.slane %v164, %v230
        %v232 = vsel %vm219, %v231, 0.0
        %v233 = vsel %vm220, %v231, 0.0
        %v234 = vsel %vm221, %v231, 0.0
        %v235 = vsel %vm222, %v231, 0.0
        %v236 = vsel %vm223, %v231, 0.0
        %v237 = vsel %vm224, %v231, 0.0
        %v238 = vsel %vm225, %v231, 0.0
        %v239 = vsel %vm226, %v231, 0.0
        %v240 = vsel %vm227, %v231, 0.0
        %vm241 = vcmp.eq.s32.totalorder %v165, 1
        %vm242 = vcmp.eq.s32.totalorder %v166, 1
        %vm243 = vcmp.eq.s32.totalorder %v167, 1
        %vm244 = vcmp.eq.s32.totalorder %v168, 1
        %vm245 = vcmp.eq.s32.totalorder %v169, 1
        %vm246 = vcmp.eq.s32.totalorder %v170, 1
        %vm247 = vcmp.eq.s32.totalorder %v171, 1
        %vm248 = vcmp.eq.s32.totalorder %v172, 1
        %vm249 = vcmp.eq.s32.totalorder %v173, 1
        %v250 = vsel %vm241, 1, 0
        %v251 = vsel %vm242, 1, 0
        %v252 = vsel %vm243, 1, 0
        %v253 = vsel %vm244, 1, 0
        %v254 = vsel %vm245, 1, 0
        %v255 = vsel %vm246, 1, 0
        %v256 = vsel %vm247, 1, 0
        %v257 = vsel %vm248, 1, 0
        %v258 = vsel %vm249, 1, 0
        %259 = vset.pattern.permute.xlu0 0
        %260 = vperm.xlu0 %259, %v250
        %v261 = vpop.permute.xlu0 %260
        %262 = vset.pattern.permute.xlu0 0
        %263 = vperm.xlu0 %262, %v251
        %v264 = vpop.permute.xlu0 %263
        %265 = vset.pattern.permute.xlu0 0
        %266 = vperm.xlu0 %265, %v252
        %v267 = vpop.permute.xlu0 %266
        %268 = vset.pattern.permute.xlu0 0
        %269 = vperm.xlu0 %268, %v253
        %v270 = vpop.permute.xlu0 %269
        %271 = vset.pattern.permute.xlu0 0
        %272 = vperm.xlu0 %271, %v254
        %v273 = vpop.permute.xlu0 %272
        %274 = vset.pattern.permute.xlu0 0
        %275 = vperm.xlu0 %274, %v255
        %v276 = vpop.permute.xlu0 %275
        %277 = vset.pattern.permute.xlu0 0
        %278 = vperm.xlu0 %277, %v256
        %v279 = vpop.permute.xlu0 %278
        %280 = vset.pattern.permute.xlu0 0
        %281 = vperm.xlu0 %280, %v257
        %v282 = vpop.permute.xlu0 %281
        %283 = vset.pattern.permute.xlu0 0
        %284 = vperm.xlu0 %283, %v258
        %v285 = vpop.permute.xlu0 %284
        %vm286 = vcmp.eq.s32.totalorder %v261, 1
        %vm287 = vcmp.eq.s32.totalorder %v264, 1
        %vm288 = vcmp.eq.s32.totalorder %v267, 1
        %vm289 = vcmp.eq.s32.totalorder %v270, 1
        %vm290 = vcmp.eq.s32.totalorder %v273, 1
        %vm291 = vcmp.eq.s32.totalorder %v276, 1
        %vm292 = vcmp.eq.s32.totalorder %v279, 1
        %vm293 = vcmp.eq.s32.totalorder %v282, 1
        %vm294 = vcmp.eq.s32.totalorder %v285, 1
        %v295 = vlaneseq
        %v296 = vshrl.u32 %v295, 7
        %v297 = vsub.s32 1, %v296
        %v298 = vrot.slane %v164, %v297
        %v299 = vsel %vm286, %v298, %v232
        %v300 = vsel %vm287, %v298, %v233
        %v301 = vsel %vm288, %v298, %v234
        %v302 = vsel %vm289, %v298, %v235
        %v303 = vsel %vm290, %v298, %v236
        %v304 = vsel %vm291, %v298, %v237
        %v305 = vsel %vm292, %v298, %v238
        %v306 = vsel %vm293, %v298, %v239
        %v307 = vsel %vm294, %v298, %v240
        %vm308 = vcmp.eq.s32.totalorder %v165, 2
        %vm309 = vcmp.eq.s32.totalorder %v166, 2
        %vm310 = vcmp.eq.s32.totalorder %v167, 2
        %vm311 = vcmp.eq.s32.totalorder %v168, 2
        %vm312 = vcmp.eq.s32.totalorder %v169, 2
        %vm313 = vcmp.eq.s32.totalorder %v170, 2
        %vm314 = vcmp.eq.s32.totalorder %v171, 2
        %vm315 = vcmp.eq.s32.totalorder %v172, 2
        %vm316 = vcmp.eq.s32.totalorder %v173, 2
        %v317 = vsel %vm308, 1, 0
        %v318 = vsel %vm309, 1, 0
        %v319 = vsel %vm310, 1, 0
        %v320 = vsel %vm311, 1, 0
        %v321 = vsel %vm312, 1, 0
        %v322 = vsel %vm313, 1, 0
        %v323 = vsel %vm314, 1, 0
        %v324 = vsel %vm315, 1, 0
        %v325 = vsel %vm316, 1, 0
        %326 = vset.pattern.permute.xlu0 0
        %327 = vperm.xlu0 %326, %v317
        %v328 = vpop.permute.xlu0 %327
        %329 = vset.pattern.permute.xlu0 0
        %330 = vperm.xlu0 %329, %v318
        %v331 = vpop.permute.xlu0 %330
        %332 = vset.pattern.permute.xlu0 0
        %333 = vperm.xlu0 %332, %v319
        %v334 = vpop.permute.xlu0 %333
        %335 = vset.pattern.permute.xlu0 0
        %336 = vperm.xlu0 %335, %v320
        %v337 = vpop.permute.xlu0 %336
        %338 = vset.pattern.permute.xlu0 0
        %339 = vperm.xlu0 %338, %v321
        %v340 = vpop.permute.xlu0 %339
        %341 = vset.pattern.permute.xlu0 0
        %342 = vperm.xlu0 %341, %v322
        %v343 = vpop.permute.xlu0 %342
        %344 = vset.pattern.permute.xlu0 0
        %345 = vperm.xlu0 %344, %v323
        %v346 = vpop.permute.xlu0 %345
        %347 = vset.pattern.permute.xlu0 0
        %348 = vperm.xlu0 %347, %v324
        %v349 = vpop.permute.xlu0 %348
        %350 = vset.pattern.permute.xlu0 0
        %351 = vperm.xlu0 %350, %v325
        %v352 = vpop.permute.xlu0 %351
        %vm353 = vcmp.eq.s32.totalorder %v328, 1
        %vm354 = vcmp.eq.s32.totalorder %v331, 1
        %vm355 = vcmp.eq.s32.totalorder %v334, 1
        %vm356 = vcmp.eq.s32.totalorder %v337, 1
        %vm357 = vcmp.eq.s32.totalorder %v340, 1
        %vm358 = vcmp.eq.s32.totalorder %v343, 1
        %vm359 = vcmp.eq.s32.totalorder %v346, 1
        %vm360 = vcmp.eq.s32.totalorder %v349, 1
        %vm361 = vcmp.eq.s32.totalorder %v352, 1
        %v362 = vlaneseq
        %v363 = vshrl.u32 %v362, 7
        %v364 = vsub.s32 2, %v363
        %v365 = vrot.slane %v164, %v364
        %v366 = vsel %vm353, %v365, %v299
        %v367 = vsel %vm354, %v365, %v300
        %v368 = vsel %vm355, %v365, %v301
        %v369 = vsel %vm356, %v365, %v302
        %v370 = vsel %vm357, %v365, %v303
        %v371 = vsel %vm358, %v365, %v304
        %v372 = vsel %vm359, %v365, %v305
        %v373 = vsel %vm360, %v365, %v306
        %v374 = vsel %vm361, %v365, %v307
        %vm375 = vcmp.eq.s32.totalorder %v165, 3
        %vm376 = vcmp.eq.s32.totalorder %v166, 3
        %vm377 = vcmp.eq.s32.totalorder %v167, 3
        %vm378 = vcmp.eq.s32.totalorder %v168, 3
        %vm379 = vcmp.eq.s32.totalorder %v169, 3
        %vm380 = vcmp.eq.s32.totalorder %v170, 3
        %vm381 = vcmp.eq.s32.totalorder %v171, 3
        %vm382 = vcmp.eq.s32.totalorder %v172, 3
        %vm383 = vcmp.eq.s32.totalorder %v173, 3
        %v384 = vsel %vm375, 1, 0
        %v385 = vsel %vm376, 1, 0
        %v386 = vsel %vm377, 1, 0
        %v387 = vsel %vm378, 1, 0
        %v388 = vsel %vm379, 1, 0
        %v389 = vsel %vm380, 1, 0
        %v390 = vsel %vm381, 1, 0
        %v391 = vsel %vm382, 1, 0
        %v392 = vsel %vm383, 1, 0
        %393 = vset.pattern.permute.xlu0 0
        %394 = vperm.xlu0 %393, %v384
        %v395 = vpop.permute.xlu0 %394
        %396 = vset.pattern.permute.xlu0 0
        %397 = vperm.xlu0 %396, %v385
        %v398 = vpop.permute.xlu0 %397
        %399 = vset.pattern.permute.xlu0 0
        %400 = vperm.xlu0 %399, %v386
        %v401 = vpop.permute.xlu0 %400
        %402 = vset.pattern.permute.xlu0 0
        %403 = vperm.xlu0 %402, %v387
        %v404 = vpop.permute.xlu0 %403
        %405 = vset.pattern.permute.xlu0 0
        %406 = vperm.xlu0 %405, %v388
        %v407 = vpop.permute.xlu0 %406
        %408 = vset.pattern.permute.xlu0 0
        %409 = vperm.xlu0 %408, %v389
        %v410 = vpop.permute.xlu0 %409
        %411 = vset.pattern.permute.xlu0 0
        %412 = vperm.xlu0 %411, %v390
        %v413 = vpop.permute.xlu0 %412
        %414 = vset.pattern.permute.xlu0 0
        %415 = vperm.xlu0 %414, %v391
        %v416 = vpop.permute.xlu0 %415
        %417 = vset.pattern.permute.xlu0 0
        %418 = vperm.xlu0 %417, %v392
        %v419 = vpop.permute.xlu0 %418
        %vm420 = vcmp.eq.s32.totalorder %v395, 1
        %vm421 = vcmp.eq.s32.totalorder %v398, 1
        %vm422 = vcmp.eq.s32.totalorder %v401, 1
        %vm423 = vcmp.eq.s32.totalorder %v404, 1
        %vm424 = vcmp.eq.s32.totalorder %v407, 1
        %vm425 = vcmp.eq.s32.totalorder %v410, 1
        %vm426 = vcmp.eq.s32.totalorder %v413, 1
        %vm427 = vcmp.eq.s32.totalorder %v416, 1
        %vm428 = vcmp.eq.s32.totalorder %v419, 1
        %v429 = vlaneseq
        %v430 = vshrl.u32 %v429, 7
        %v431 = vsub.s32 3, %v430
        %v432 = vrot.slane %v164, %v431
        %v433 = vsel %vm420, %v432, %v366
        %v434 = vsel %vm421, %v432, %v367
        %v435 = vsel %vm422, %v432, %v368
        %v436 = vsel %vm423, %v432, %v369
        %v437 = vsel %vm424, %v432, %v370
        %v438 = vsel %vm425, %v432, %v371
        %v439 = vsel %vm426, %v432, %v372
        %v440 = vsel %vm427, %v432, %v373
        %v441 = vsel %vm428, %v432, %v374
        %vm442 = vcmp.eq.s32.totalorder %v165, 4
        %vm443 = vcmp.eq.s32.totalorder %v166, 4
        %vm444 = vcmp.eq.s32.totalorder %v167, 4
        %vm445 = vcmp.eq.s32.totalorder %v168, 4
        %vm446 = vcmp.eq.s32.totalorder %v169, 4
        %vm447 = vcmp.eq.s32.totalorder %v170, 4
        %vm448 = vcmp.eq.s32.totalorder %v171, 4
        %vm449 = vcmp.eq.s32.totalorder %v172, 4
        %vm450 = vcmp.eq.s32.totalorder %v173, 4
        %v451 = vsel %vm442, 1, 0
        %v452 = vsel %vm443, 1, 0
        %v453 = vsel %vm444, 1, 0
        %v454 = vsel %vm445, 1, 0
        %v455 = vsel %vm446, 1, 0
        %v456 = vsel %vm447, 1, 0
        %v457 = vsel %vm448, 1, 0
        %v458 = vsel %vm449, 1, 0
        %v459 = vsel %vm450, 1, 0
        %460 = vset.pattern.permute.xlu0 0
        %461 = vperm.xlu0 %460, %v451
        %v462 = vpop.permute.xlu0 %461
        %463 = vset.pattern.permute.xlu0 0
        %464 = vperm.xlu0 %463, %v452
        %v465 = vpop.permute.xlu0 %464
        %466 = vset.pattern.permute.xlu0 0
        %467 = vperm.xlu0 %466, %v453
        %v468 = vpop.permute.xlu0 %467
        %469 = vset.pattern.permute.xlu0 0
        %470 = vperm.xlu0 %469, %v454
        %v471 = vpop.permute.xlu0 %470
        %472 = vset.pattern.permute.xlu0 0
        %473 = vperm.xlu0 %472, %v455
        %v474 = vpop.permute.xlu0 %473
        %475 = vset.pattern.permute.xlu0 0
        %476 = vperm.xlu0 %475, %v456
        %v477 = vpop.permute.xlu0 %476
        %478 = vset.pattern.permute.xlu0 0
        %479 = vperm.xlu0 %478, %v457
        %v480 = vpop.permute.xlu0 %479
        %481 = vset.pattern.permute.xlu0 0
        %482 = vperm.xlu0 %481, %v458
        %v483 = vpop.permute.xlu0 %482
        %484 = vset.pattern.permute.xlu0 0
        %485 = vperm.xlu0 %484, %v459
        %v486 = vpop.permute.xlu0 %485
        %vm487 = vcmp.eq.s32.totalorder %v462, 1
        %vm488 = vcmp.eq.s32.totalorder %v465, 1
        %vm489 = vcmp.eq.s32.totalorder %v468, 1
        %vm490 = vcmp.eq.s32.totalorder %v471, 1
        %vm491 = vcmp.eq.s32.totalorder %v474, 1
        %vm492 = vcmp.eq.s32.totalorder %v477, 1
        %vm493 = vcmp.eq.s32.totalorder %v480, 1
        %vm494 = vcmp.eq.s32.totalorder %v483, 1
        %vm495 = vcmp.eq.s32.totalorder %v486, 1
        %v496 = vlaneseq
        %v497 = vshrl.u32 %v496, 7
        %v498 = vsub.s32 4, %v497
        %v499 = vrot.slane %v164, %v498
        %v500 = vsel %vm487, %v499, %v433
        %v501 = vsel %vm488, %v499, %v434
        %v502 = vsel %vm489, %v499, %v435
        %v503 = vsel %vm490, %v499, %v436
        %v504 = vsel %vm491, %v499, %v437
        %v505 = vsel %vm492, %v499, %v438
        %v506 = vsel %vm493, %v499, %v439
        %v507 = vsel %vm494, %v499, %v440
        %v508 = vsel %vm495, %v499, %v441
        %vm509 = vcmp.eq.s32.totalorder %v165, 5
        %vm510 = vcmp.eq.s32.totalorder %v166, 5
        %vm511 = vcmp.eq.s32.totalorder %v167, 5
        %vm512 = vcmp.eq.s32.totalorder %v168, 5
        %vm513 = vcmp.eq.s32.totalorder %v169, 5
        %vm514 = vcmp.eq.s32.totalorder %v170, 5
        %vm515 = vcmp.eq.s32.totalorder %v171, 5
        %vm516 = vcmp.eq.s32.totalorder %v172, 5
        %vm517 = vcmp.eq.s32.totalorder %v173, 5
        %v518 = vsel %vm509, 1, 0
        %v519 = vsel %vm510, 1, 0
        %v520 = vsel %vm511, 1, 0
        %v521 = vsel %vm512, 1, 0
        %v522 = vsel %vm513, 1, 0
        %v523 = vsel %vm514, 1, 0
        %v524 = vsel %vm515, 1, 0
        %v525 = vsel %vm516, 1, 0
        %v526 = vsel %vm517, 1, 0
        %527 = vset.pattern.permute.xlu0 0
        %528 = vperm.xlu0 %527, %v518
        %v529 = vpop.permute.xlu0 %528
        %530 = vset.pattern.permute.xlu0 0
        %531 = vperm.xlu0 %530, %v519
        %v532 = vpop.permute.xlu0 %531
        %533 = vset.pattern.permute.xlu0 0
        %534 = vperm.xlu0 %533, %v520
        %v535 = vpop.permute.xlu0 %534
        %536 = vset.pattern.permute.xlu0 0
        %537 = vperm.xlu0 %536, %v521
        %v538 = vpop.permute.xlu0 %537
        %539 = vset.pattern.permute.xlu0 0
        %540 = vperm.xlu0 %539, %v522
        %v541 = vpop.permute.xlu0 %540
        %542 = vset.pattern.permute.xlu0 0
        %543 = vperm.xlu0 %542, %v523
        %v544 = vpop.permute.xlu0 %543
        %545 = vset.pattern.permute.xlu0 0
        %546 = vperm.xlu0 %545, %v524
        %v547 = vpop.permute.xlu0 %546
        %548 = vset.pattern.permute.xlu0 0
        %549 = vperm.xlu0 %548, %v525
        %v550 = vpop.permute.xlu0 %549
        %551 = vset.pattern.permute.xlu0 0
        %552 = vperm.xlu0 %551, %v526
        %v553 = vpop.permute.xlu0 %552
        %vm554 = vcmp.eq.s32.totalorder %v529, 1
        %vm555 = vcmp.eq.s32.totalorder %v532, 1
        %vm556 = vcmp.eq.s32.totalorder %v535, 1
        %vm557 = vcmp.eq.s32.totalorder %v538, 1
        %vm558 = vcmp.eq.s32.totalorder %v541, 1
        %vm559 = vcmp.eq.s32.totalorder %v544, 1
        %vm560 = vcmp.eq.s32.totalorder %v547, 1
        %vm561 = vcmp.eq.s32.totalorder %v550, 1
        %vm562 = vcmp.eq.s32.totalorder %v553, 1
        %v563 = vlaneseq
        %v564 = vshrl.u32 %v563, 7
        %v565 = vsub.s32 5, %v564
        %v566 = vrot.slane %v164, %v565
        %v567 = vsel %vm554, %v566, %v500
        %v568 = vsel %vm555, %v566, %v501
        %v569 = vsel %vm556, %v566, %v502
        %v570 = vsel %vm557, %v566, %v503
        %v571 = vsel %vm558, %v566, %v504
        %v572 = vsel %vm559, %v566, %v505
        %v573 = vsel %vm560, %v566, %v506
        %v574 = vsel %vm561, %v566, %v507
        %v575 = vsel %vm562, %v566, %v508
        %vm576 = vcmp.eq.s32.totalorder %v165, 6
        %vm577 = vcmp.eq.s32.totalorder %v166, 6
        %vm578 = vcmp.eq.s32.totalorder %v167, 6
        %vm579 = vcmp.eq.s32.totalorder %v168, 6
        %vm580 = vcmp.eq.s32.totalorder %v169, 6
        %vm581 = vcmp.eq.s32.totalorder %v170, 6
        %vm582 = vcmp.eq.s32.totalorder %v171, 6
        %vm583 = vcmp.eq.s32.totalorder %v172, 6
        %vm584 = vcmp.eq.s32.totalorder %v173, 6
        %v585 = vsel %vm576, 1, 0
        %v586 = vsel %vm577, 1, 0
        %v587 = vsel %vm578, 1, 0
        %v588 = vsel %vm579, 1, 0
        %v589 = vsel %vm580, 1, 0
        %v590 = vsel %vm581, 1, 0
        %v591 = vsel %vm582, 1, 0
        %v592 = vsel %vm583, 1, 0
        %v593 = vsel %vm584, 1, 0
        %594 = vset.pattern.permute.xlu0 0
        %595 = vperm.xlu0 %594, %v585
        %v596 = vpop.permute.xlu0 %595
        %597 = vset.pattern.permute.xlu0 0
        %598 = vperm.xlu0 %597, %v586
        %v599 = vpop.permute.xlu0 %598
        %600 = vset.pattern.permute.xlu0 0
        %601 = vperm.xlu0 %600, %v587
        %v602 = vpop.permute.xlu0 %601
        %603 = vset.pattern.permute.xlu0 0
        %604 = vperm.xlu0 %603, %v588
        %v605 = vpop.permute.xlu0 %604
        %606 = vset.pattern.permute.xlu0 0
        %607 = vperm.xlu0 %606, %v589
        %v608 = vpop.permute.xlu0 %607
        %609 = vset.pattern.permute.xlu0 0
        %610 = vperm.xlu0 %609, %v590
        %v611 = vpop.permute.xlu0 %610
        %612 = vset.pattern.permute.xlu0 0
        %613 = vperm.xlu0 %612, %v591
        %v614 = vpop.permute.xlu0 %613
        %615 = vset.pattern.permute.xlu0 0
        %616 = vperm.xlu0 %615, %v592
        %v617 = vpop.permute.xlu0 %616
        %618 = vset.pattern.permute.xlu0 0
        %619 = vperm.xlu0 %618, %v593
        %v620 = vpop.permute.xlu0 %619
        %vm621 = vcmp.eq.s32.totalorder %v596, 1
        %vm622 = vcmp.eq.s32.totalorder %v599, 1
        %vm623 = vcmp.eq.s32.totalorder %v602, 1
        %vm624 = vcmp.eq.s32.totalorder %v605, 1
        %vm625 = vcmp.eq.s32.totalorder %v608, 1
        %vm626 = vcmp.eq.s32.totalorder %v611, 1
        %vm627 = vcmp.eq.s32.totalorder %v614, 1
        %vm628 = vcmp.eq.s32.totalorder %v617, 1
        %vm629 = vcmp.eq.s32.totalorder %v620, 1
        %v630 = vlaneseq
        %v631 = vshrl.u32 %v630, 7
        %v632 = vsub.s32 6, %v631
        %v633 = vrot.slane %v164, %v632
        %v634 = vsel %vm621, %v633, %v567
        %v635 = vsel %vm622, %v633, %v568
        %v636 = vsel %vm623, %v633, %v569
        %v637 = vsel %vm624, %v633, %v570
        %v638 = vsel %vm625, %v633, %v571
        %v639 = vsel %vm626, %v633, %v572
        %v640 = vsel %vm627, %v633, %v573
        %v641 = vsel %vm628, %v633, %v574
        %v642 = vsel %vm629, %v633, %v575
        %vm643 = vcmp.eq.s32.totalorder %v165, 7
        %vm644 = vcmp.eq.s32.totalorder %v166, 7
        %vm645 = vcmp.eq.s32.totalorder %v167, 7
        %vm646 = vcmp.eq.s32.totalorder %v168, 7
        %vm647 = vcmp.eq.s32.totalorder %v169, 7
        %vm648 = vcmp.eq.s32.totalorder %v170, 7
        %vm649 = vcmp.eq.s32.totalorder %v171, 7
        %vm650 = vcmp.eq.s32.totalorder %v172, 7
        %vm651 = vcmp.eq.s32.totalorder %v173, 7
        %v652 = vsel %vm643, 1, 0
        %v653 = vsel %vm644, 1, 0
        %v654 = vsel %vm645, 1, 0
        %v655 = vsel %vm646, 1, 0
        %v656 = vsel %vm647, 1, 0
        %v657 = vsel %vm648, 1, 0
        %v658 = vsel %vm649, 1, 0
        %v659 = vsel %vm650, 1, 0
        %v660 = vsel %vm651, 1, 0
        %661 = vset.pattern.permute.xlu0 0
        %662 = vperm.xlu0 %661, %v652
        %v663 = vpop.permute.xlu0 %662
        %664 = vset.pattern.permute.xlu0 0
        %665 = vperm.xlu0 %664, %v653
        %v666 = vpop.permute.xlu0 %665
        %667 = vset.pattern.permute.xlu0 0
        %668 = vperm.xlu0 %667, %v654
        %v669 = vpop.permute.xlu0 %668
        %670 = vset.pattern.permute.xlu0 0
        %671 = vperm.xlu0 %670, %v655
        %v672 = vpop.permute.xlu0 %671
        %673 = vset.pattern.permute.xlu0 0
        %674 = vperm.xlu0 %673, %v656
        %v675 = vpop.permute.xlu0 %674
        %676 = vset.pattern.permute.xlu0 0
        %677 = vperm.xlu0 %676, %v657
        %v678 = vpop.permute.xlu0 %677
        %679 = vset.pattern.permute.xlu0 0
        %680 = vperm.xlu0 %679, %v658
        %v681 = vpop.permute.xlu0 %680
        %682 = vset.pattern.permute.xlu0 0
        %683 = vperm.xlu0 %682, %v659
        %v684 = vpop.permute.xlu0 %683
        %685 = vset.pattern.permute.xlu0 0
        %686 = vperm.xlu0 %685, %v660
        %v687 = vpop.permute.xlu0 %686
        %vm688 = vcmp.eq.s32.totalorder %v663, 1
        %vm689 = vcmp.eq.s32.totalorder %v666, 1
        %vm690 = vcmp.eq.s32.totalorder %v669, 1
        %vm691 = vcmp.eq.s32.totalorder %v672, 1
        %vm692 = vcmp.eq.s32.totalorder %v675, 1
        %vm693 = vcmp.eq.s32.totalorder %v678, 1
        %vm694 = vcmp.eq.s32.totalorder %v681, 1
        %vm695 = vcmp.eq.s32.totalorder %v684, 1
        %vm696 = vcmp.eq.s32.totalorder %v687, 1
        %v697 = vlaneseq
        %v698 = vshrl.u32 %v697, 7
        %v699 = vsub.s32 7, %v698
        %v700 = vrot.slane %v164, %v699
        %v701 = vsel %vm688, %v700, %v634
        %v702 = vsel %vm689, %v700, %v635
        %v703 = vsel %vm690, %v700, %v636
        %v704 = vsel %vm691, %v700, %v637
        %v705 = vsel %vm692, %v700, %v638
        %v706 = vsel %vm693, %v700, %v639
        %v707 = vsel %vm694, %v700, %v640
        %v708 = vsel %vm695, %v700, %v641
        %v709 = vsel %vm696, %v700, %v642
        %710 = vst [vmem:[%s156] sm:$0xff] %v701
        %711 = vst [vmem:[%s156 + $0x8] sm:$0xff] %v702
        %712 = vst [vmem:[%s156 + $0x10] sm:$0xff] %v703
        %713 = vst [vmem:[%s156 + $0x18] sm:$0xff] %v704
        %714 = vst [vmem:[%s156 + $0x20] sm:$0xff] %v705
        %715 = vst [vmem:[%s156 + $0x28] sm:$0xff] %v706
        %716 = vst [vmem:[%s156 + $0x30] sm:$0xff] %v707
        %717 = vst [vmem:[%s156 + $0x38] sm:$0xff] %v708
        %718 = vst [vmem:[%s156 + $0x40] sm:$0xff] %v709
        %s719 = sand.u32 %s87, 1
        %s720 = scalar_lea.sflag [#allocation3], %s719
        %s721 = sand.u32 %s87, 1
        %s722 = smul.addr %s721, 72
        %s723 = scalar_lea.vmem [#allocation2], %s722
        // Predicated region
        $region29: #{_duplicate_transitions_impl.1} parent=27 // pred_check
          %p724 = pneg %p97
        $region30: #{_duplicate_transitions_impl.1} parent=27 // pred_check_branch
          %726 = sbr.rel (%p724) target = $region32
        $region31: #{_duplicate_transitions_impl.1} parent=27 // pred_region
          %s728 = ssub.s32 1152, 1152
          %729 = vsyncadd %s720, %s728
          %s730 = smul.addr %s20, 9
          %s731 = sadd.s32 %s21, %s730
          %s732 = smul.addr %s731, 128
          %s733 = scalar_lea.hbm %s2, %s732
          %s734 = sshll.u32 %s723, 4
          %s735 = int_to_ptr.vmem [resolvable:$true] %s734
          %740 = dma.vmem_to_hbm [thread:$0]  %s735, 1152, %s733, %s720, 128, 128, 8
        $region32: #{_duplicate_transitions_impl.1} parent=27 // pred_fallthru
          _
      $region28: #{_duplicate_transitions_impl.1} parent=5 // pred_fallthru
        _
      %p741 = scmp.le.s32.totalorder 2, %s11
      // Predicated region
      $region33: #{_duplicate_transitions_impl.1} parent=5 // pred_check
        %p742 = pneg %p741
      $region34: #{_duplicate_transitions_impl.1} parent=5 // pred_check_branch
        %744 = sbr.rel (%p742) target = $region36
      $region35: #{_duplicate_transitions_impl.1} parent=5 // pred_region
        %s745 = ssub.s32 %s11, 2
        // Predicated region
        $region37: #{_duplicate_transitions_impl.1} parent=35 // pred_check
          %p746 = pneg %p103
        $region38: #{_duplicate_transitions_impl.1} parent=35 // pred_check_branch
          %748 = sbr.rel (%p746) target = $region40
        $region39: #{_duplicate_transitions_impl.1} parent=35 // pred_region
          %s749 = sand.u32 %s88, 1
          %s750 = scalar_lea.sflag [#allocation3], %s749
          %s751 = sand.u32 %s88, 1
          %s752 = smul.addr %s751, 72
          %s753 = scalar_lea.vmem [#allocation2], %s752
          %754 = dma.done %s750, 1152
        $region40: #{_duplicate_transitions_impl.1} parent=35 // pred_fallthru
          _
      $region36: #{_duplicate_transitions_impl.1} parent=5 // pred_fallthru
        _
    $region6: #{_duplicate_transitions_impl.1} parent=1 // loop_footer
      %s15 = sadd.s32 1, %s11
    $region7: #{_duplicate_transitions_impl.1} parent=1 // loop_footer_branch
      %10 = sbr.rel target = $region3
    $region8: #{_duplicate_transitions_impl.1} parent=1 // loop_exit
      _
    %755 = vsyncpa [#allocation3], 1
    %s756 = scalar_lea.sflag [#allocation3], 1
    %757 = vsyncpa %s756, 1

</llo_original>
